<compile_context>
chip_gen: v7x
topology: tpu7x:2x2x1
jax: 0.10.0
libtpu: 0.0.40
codegen_flags: <defaults>
</compile_context>

<pallas_src>
import functools

import jax
import jax.numpy as jnp
from jax.experimental import pallas as pl
from jax.experimental.pallas import tpu as pltpu


def _time_masking_kernel(n_masks, t0_ref, t1_ref, mv_ref, x_hbm, o_hbm, buf, sem):
    """Masked fill of one (tT, D) time tile of one batch row (in-place via alias).

    t0_ref/t1_ref : (B * n_masks,) int32 SMEM  -- flattened [t0, t1) intervals
    mv_ref        : (B,)           f32   SMEM  -- per-batch fill value
    x_hbm, o_hbm  : (B, T, D)      HBM (ANY)   -- output aliases input
    buf           : (tT, D)        VMEM scratch
    sem           : (1,)           DMA semaphore
    """
    b = pl.program_id(0)
    ti = pl.program_id(1)
    T = x_hbm.shape[1]
    tT = buf.shape[0]

    # Global time range [lo, lo + tT) of this tile.  For ragged T the last tile
    # is clamped so the tail is still covered; overlapped rows are re-masked,
    # which is idempotent (time axis runs sequentially per core).
    if T % tT == 0:
        lo = pl.multiple_of(ti * tT, tT)
    else:
        lo = jnp.minimum(ti * tT, T - tT)
    hi = lo + tT

    # Scalar early-out: does any non-empty interval intersect this tile?
    # Pure scalar-ALU work on SMEM values -- clean tiles cost essentially nothing.
    base = b * n_masks
    t0 = t0_ref[base]
    t1 = t1_ref[base]
    dirty = (t0 < hi) & (t1 > lo) & (t1 > t0)
    for m in range(1, n_masks):
        t0 = t0_ref[base + m]
        t1 = t1_ref[base + m]
        dirty = dirty | ((t0 < hi) & (t1 > lo) & (t1 > t0))

    # Clean tiles: nothing to do.  The output is aliased to the input, so the
    # original rows are already in place -- zero HBM traffic for them.
    @pl.when(dirty)
    def _():
        cp_in = pltpu.make_async_copy(x_hbm.at[b, pl.ds(lo, tT), :], buf, sem.at[0])
        cp_in.start()
        cp_in.wait()

        # Rebuild the per-row mask only on this rare path (rare => the
        # lane-sparse (tT,1) compares never become the binding VALU slot).
        t_idx = lo + jax.lax.broadcasted_iota(jnp.int32, (tT, 1), 0)
        hit = (t_idx >= t0_ref[base]) & (t_idx < t1_ref[base])
        for m in range(1, n_masks):
            hit = hit | ((t_idx >= t0_ref[base + m]) & (t_idx < t1_ref[base + m]))

        mv = mv_ref[b].astype(buf.dtype)              # cast fill value once, stay in x dtype
        buf[...] = jnp.where(hit, mv, buf[...])

        cp_out = pltpu.make_async_copy(buf, o_hbm.at[b, pl.ds(lo, tT), :], sem.at[0])
        cp_out.start()
        cp_out.wait()


def _pick_time_tile(B, T, D, itemsize, target_bytes=1 << 20):
    """Tile for the masked-tile-skip kernel: ~1 MiB balances wasted traffic on
    partially-masked tiles against per-DMA latency; shrink further so the grid
    has >= ~8 steps for v7x megacore load balance (harmless on v5e/v6e)."""
    sub = {4: 8, 2: 16, 1: 32}.get(itemsize, 8)
    row_bytes = max(1, D * itemsize)
    tT = max(sub, target_bytes // row_bytes)
    if tT >= T:
        tT = T
    else:
        tT = max(sub, (tT // sub) * sub)
    while tT > sub and (B * pl.cdiv(T, tT)) < 8:
        new_tT = max(sub, ((tT // 2) // sub) * sub)
        if new_tT == tT:
            break
        tT = new_tT
    return min(tT, T)


def time_masking_pallas(x, t_0, t_1, mask_value, *, time_tile=None):
    """Apply time masking given per-batch mask intervals.

    x          : (B, T, D)
    t_0, t_1   : (B, n_masks) int mask interval [t_0, t_1)
    mask_value : (B,) fill value per batch element
    returns (masked_x (B, T, D), tmask (B, T) bool)
    """
    B, T, D = x.shape
    n_masks = t_0.shape[1]

    t0i = t_0.astype(jnp.int32)
    t1i = t_1.astype(jnp.int32)
    # 1-D SMEM arrays: avoid the [ceil(B/8)*8, 128]-word padding of 2-D SMEM.
    t0_flat = t0i.reshape(-1)
    t1_flat = t1i.reshape(-1)
    mv = mask_value.astype(jnp.float32)

    itemsize = jnp.dtype(x.dtype).itemsize
    if time_tile is not None:
        tT = min(int(time_tile), T)
    else:
        tT = _pick_time_tile(B, T, D, itemsize)
    nT = pl.cdiv(T, tT)

    # Manual-DMA design: only one (tT, D) scratch buffer lives in VMEM.  Raise
    # the scoped limit modestly (safe on v5e/v6e's 128 MiB and v7x's 64 MiB
    # physical VMEM) in case a caller asks for a very large tile.
    tile_bytes = tT * D * itemsize
    vmem_limit = int(min(56 << 20, max(32 << 20, tile_bytes + (16 << 20))))

    out = pl.pallas_call(
        functools.partial(_time_masking_kernel, n_masks),
        out_shape=jax.ShapeDtypeStruct((B, T, D), x.dtype),
        grid=(B, nT),
        in_specs=[
            pl.BlockSpec(memory_space=pltpu.MemorySpace.SMEM),   # t0 (flat)
            pl.BlockSpec(memory_space=pltpu.MemorySpace.SMEM),   # t1 (flat)
            pl.BlockSpec(memory_space=pltpu.MemorySpace.SMEM),   # mask_value
            pl.BlockSpec(memory_space=pl.ANY),                    # x stays in HBM
        ],
        out_specs=pl.BlockSpec(memory_space=pl.ANY),              # out stays in HBM
        scratch_shapes=[
            pltpu.VMEM((tT, D), x.dtype),
            pltpu.SemaphoreType.DMA((1,)),
        ],
        input_output_aliases={3: 0},                              # out aliases x
        compiler_params=pltpu.CompilerParams(
            dimension_semantics=("parallel", "arbitrary"),
            vmem_limit_bytes=vmem_limit),
    )(t0_flat, t1_flat, mv, x)

    # tmask (the module's second return value) is a trivial compare + any;
    # keep it in plain JAX, off the kernel's store path.
    t_idx = jnp.arange(T, dtype=jnp.int32)[None, :, None]
    tmask = jnp.any((t_idx >= t0i[:, None, :]) & (t_idx < t1i[:, None, :]), axis=-1)
    return out, tmask


def time_masking_forward(x, key, *, n_masks, mask_param, ratio,
                         attn_mask=None, zero_masking=True, time_tile=None):
    """JAX equivalent of TimeMasking.forward (torch.rand draws via jax.random)."""
    B, T, D = x.shape

    if attn_mask is not None:
        lengths = attn_mask.astype(jnp.int32).sum(axis=1)
    else:
        lengths = jnp.full((B,), T, dtype=jnp.int32)

    if zero_masking:
        mask_value = jnp.zeros((B,), dtype=jnp.float32)
    else:
        if attn_mask is None:
            mask_value = x.mean(axis=(1, 2)).astype(jnp.float32)
        else:
            # Matches the PyTorch reference exactly: the masked (T, D) sum is
            # divided by `lengths` only (not lengths * D).
            mask_value = (jnp.where(attn_mask[:, :, None], x, 0.0)
                          .sum(axis=(1, 2)) / lengths.astype(x.dtype)
                          ).astype(jnp.float32)

    max_num_maskings = jnp.minimum(
        (lengths.astype(jnp.float32) * ratio).astype(jnp.int32),
        jnp.int32(mask_param),
    )

    # Matches the reference: t ~ floor(U[0,1) * max_num_maskings),
    # t_0 ~ floor(U[0,1) * (lengths - max_num_maskings)), t_1 = t_0 + t.
    k1, k2 = jax.random.split(key)
    r_t = jax.random.uniform(k1, (B, n_masks), dtype=jnp.float32)
    r_t0 = jax.random.uniform(k2, (B, n_masks), dtype=jnp.float32)
    t = (r_t * max_num_maskings[:, None].astype(jnp.float32)).astype(jnp.int32)
    t_0 = (r_t0 * (lengths - max_num_maskings)[:, None].astype(jnp.float32)
           ).astype(jnp.int32)
    t_1 = t_0 + t

    return time_masking_pallas(x, t_0, t_1, mask_value, time_tile=time_tile)


if __name__ == "__main__":
    key = jax.random.PRNGKey(0)
    kx, km1, km2, kx3 = jax.random.split(key, 4)

    n_masks, mask_param, ratio = 2, 16, 0.3
    B, T, D = 2, 64, 128
    x = jax.random.normal(kx, (B, T, D), dtype=jnp.float32)

    # --- test 0: direct kernel check with hand-picked intervals (guarantees
    #     dirty tiles, an empty interval, and clean tiles are all exercised).
    t_0 = jnp.array([[5, 30], [0, 40]], dtype=jnp.int32)
    t_1 = jnp.array([[12, 35], [0, 48]], dtype=jnp.int32)   # [0,0) is empty
    mv = jnp.array([0.5, -1.25], dtype=jnp.float32)
    out0, tmask0 = time_masking_pallas(x, t_0, t_1, mv, time_tile=16)
    jax.block_until_ready((out0, tmask0))
    idx = jnp.arange(T, dtype=jnp.int32)[None, :, None]
    tmask0_ref = jnp.any((idx >= t_0[:, None, :]) & (idx < t_1[:, None, :]), axis=-1)
    assert bool(jnp.all(tmask0 == tmask0_ref))
    ref0 = jnp.where(tmask0[:, :, None], mv[:, None, None].astype(x.dtype), x)
    assert jnp.allclose(out0, ref0)

    # --- test 1: zero-masking forward path, tiled time axis (grid = (2, 4)).
    out1, tmask1 = time_masking_forward(
        x, km1, n_masks=n_masks, mask_param=mask_param, ratio=ratio,
        attn_mask=None, zero_masking=True, time_tile=16)
    jax.block_until_ready((out1, tmask1))
    assert out1.shape == (B, T, D) and tmask1.shape == (B, T)
    ref1 = jnp.where(tmask1[:, :, None], jnp.zeros((), x.dtype), x)
    assert jnp.allclose(out1, ref1)

    # --- test 2: mean-fill path with an attention mask (exercises the SMEM
    #     float fill value); auto-picked tile.
    lengths = jnp.array([T, T // 2], dtype=jnp.int32)
    attn_mask = jnp.arange(T, dtype=jnp.int32)[None, :] < lengths[:, None]
    out2, tmask2 = time_masking_forward(
        x, km2, n_masks=n_masks, mask_param=mask_param, ratio=ratio,
        attn_mask=attn_mask, zero_masking=False)
    jax.block_until_ready((out2, tmask2))
    mv_expected = (jnp.where(attn_mask[:, :, None], x, 0.0).sum(axis=(1, 2))
                   / lengths.astype(x.dtype)).astype(jnp.float32)
    ref2 = jnp.where(tmask2[:, :, None],
                     mv_expected[:, None, None].astype(x.dtype), x)
    assert jnp.allclose(out2, ref2)

    # --- test 3: ragged T (T % tile != 0) -> exercises the clamped last tile
    #     and the idempotent overlap re-masking.
    T3 = 56
    x3 = jax.random.normal(kx3, (B, T3, D), dtype=jnp.float32)
    t_0r = jnp.array([[3, 44], [20, 0]], dtype=jnp.int32)
    t_1r = jnp.array([[10, 56], [28, 0]], dtype=jnp.int32)
    mvr = jnp.zeros((B,), dtype=jnp.float32)
    out3, tmask3 = time_masking_pallas(x3, t_0r, t_1r, mvr, time_tile=16)
    jax.block_until_ready((out3, tmask3))
    ref3 = jnp.where(tmask3[:, :, None], jnp.zeros((), x3.dtype), x3)
    assert jnp.allclose(out3, ref3)

    print("KERNEL_OK")
</pallas_src>

<mosaic_0001>
module attributes {stable_mosaic.version = 11 : i64} {
  func.func @_time_masking_kernel(%arg0: i32, %arg1: i32, %arg2: memref<4xi32, #tpu.memory_space<smem>>, %arg3: memref<4xi32, #tpu.memory_space<smem>>, %arg4: memref<2xf32, #tpu.memory_space<smem>>, %arg5: memref<2x64x128xf32, #tpu.memory_space<any>>, %arg6: memref<2x64x128xf32, #tpu.memory_space<any>>, %arg7: memref<16x128xf32, #tpu.memory_space<vmem>>, %arg8: memref<1x!tpu.dma_semaphore, #tpu.memory_space<semaphore_mem>>) attributes {dimension_semantics = [#tpu.dimension_semantics<parallel>, #tpu.dimension_semantics<arbitrary>], iteration_bounds = array<i64: 2, 4>, scalar_prefetch = 0 : i64, scratch_operands = 2 : i64, tpu.core_type = #tpu.core_type<tc>, window_params = [{transform_indices = @transform_0, window_bounds = array<i64: 4>}, {transform_indices = @transform_1, window_bounds = array<i64: 4>}, {transform_indices = @transform_2, window_bounds = array<i64: 2>}, {}, {}]} {
    %c16_i32 = arith.constant 16 : i32
    %0 = arith.muli %arg1, %c16_i32 : i32
    %1 = tpu.assume_multiple %0, 16 : i32
    %c16_i32_0 = arith.constant 16 : i32
    %2 = arith.addi %1, %c16_i32_0 : i32
    %c2_i32 = arith.constant 2 : i32
    %3 = arith.muli %arg0, %c2_i32 : i32
    %4 = arith.index_cast %3 : i32 to index
    %5 = memref.load %arg2[%4] : memref<4xi32, #tpu.memory_space<smem>>
    %6 = arith.index_cast %3 : i32 to index
    %7 = memref.load %arg3[%6] : memref<4xi32, #tpu.memory_space<smem>>
    %8 = arith.cmpi slt, %5, %2 : i32
    %9 = arith.cmpi sgt, %7, %1 : i32
    %10 = arith.andi %8, %9 : i1
    %11 = arith.cmpi sgt, %7, %5 : i32
    %12 = arith.andi %10, %11 : i1
    %c1_i32 = arith.constant 1 : i32
    %13 = arith.addi %3, %c1_i32 : i32
    %14 = arith.index_cast %13 : i32 to index
    %15 = memref.load %arg2[%14] : memref<4xi32, #tpu.memory_space<smem>>
    %c1_i32_1 = arith.constant 1 : i32
    %16 = arith.addi %3, %c1_i32_1 : i32
    %17 = arith.index_cast %16 : i32 to index
    %18 = memref.load %arg3[%17] : memref<4xi32, #tpu.memory_space<smem>>
    %19 = arith.cmpi slt, %15, %2 : i32
    %20 = arith.cmpi sgt, %18, %1 : i32
    %21 = arith.andi %19, %20 : i1
    %22 = arith.cmpi sgt, %18, %15 : i32
    %23 = arith.andi %21, %22 : i1
    %24 = arith.ori %12, %23 : i1
    %25 = arith.extui %24 : i1 to i32
    %c0_i32 = arith.constant 0 : i32
    %26 = arith.cmpi ne, %25, %c0_i32 : i32
    scf.if %26 {
      %c0_i32_2 = arith.constant 0 : i32
      %c0_i32_3 = arith.constant 0 : i32
      %27 = tpu.memref_slice %arg5[%arg0, %1, %c0_i32_3] : memref<2x64x128xf32, #tpu.memory_space<any>> -> memref<1x16x128xf32, #tpu.memory_space<any>>
      %28 = tpu.memref_squeeze %27 : memref<1x16x128xf32, #tpu.memory_space<any>> -> memref<16x128xf32, #tpu.memory_space<any>>
      %29 = tpu.memref_slice %arg8[%c0_i32_2] : memref<1x!tpu.dma_semaphore, #tpu.memory_space<semaphore_mem>> -> memref<1x!tpu.dma_semaphore, #tpu.memory_space<semaphore_mem>>
      %30 = tpu.memref_squeeze %29 : memref<1x!tpu.dma_semaphore, #tpu.memory_space<semaphore_mem>> -> memref<!tpu.dma_semaphore, #tpu.memory_space<semaphore_mem>>
      tpu.enqueue_dma source(%28 : memref<16x128xf32, #tpu.memory_space<any>>) target(%arg7 : memref<16x128xf32, #tpu.memory_space<vmem>>) target_semaphore(%30 : memref<!tpu.dma_semaphore, #tpu.memory_space<semaphore_mem>>)
      %c0_i32_4 = arith.constant 0 : i32
      %c0_i32_5 = arith.constant 0 : i32
      %31 = tpu.memref_slice %arg5[%arg0, %1, %c0_i32_5] : memref<2x64x128xf32, #tpu.memory_space<any>> -> memref<1x16x128xf32, #tpu.memory_space<any>>
      %32 = tpu.memref_squeeze %31 : memref<1x16x128xf32, #tpu.memory_space<any>> -> memref<16x128xf32, #tpu.memory_space<any>>
      %33 = tpu.memref_slice %arg8[%c0_i32_4] : memref<1x!tpu.dma_semaphore, #tpu.memory_space<semaphore_mem>> -> memref<1x!tpu.dma_semaphore, #tpu.memory_space<semaphore_mem>>
      %34 = tpu.memref_squeeze %33 : memref<1x!tpu.dma_semaphore, #tpu.memory_space<semaphore_mem>> -> memref<!tpu.dma_semaphore, #tpu.memory_space<semaphore_mem>>
      tpu.wait_dma2 semaphore(%34 : memref<!tpu.dma_semaphore, #tpu.memory_space<semaphore_mem>>) src(%32 : memref<16x128xf32, #tpu.memory_space<any>>) dst(%arg7 : memref<16x128xf32, #tpu.memory_space<vmem>>)
      %35 = tpu.iota {dimensions = array<i32: 0>} : vector<16x1xi32>
      %36 = vector.broadcast %1 : i32 to vector<16x1xi32>
      %37 = arith.addi %36, %35 : vector<16x1xi32>
      %38 = arith.index_cast %3 : i32 to index
      %39 = memref.load %arg2[%38] : memref<4xi32, #tpu.memory_space<smem>>
      %40 = vector.broadcast %39 : i32 to vector<16x1xi32>
      %41 = arith.cmpi sge, %37, %40 : vector<16x1xi32>
      %42 = arith.index_cast %3 : i32 to index
      %43 = memref.load %arg3[%42] : memref<4xi32, #tpu.memory_space<smem>>
      %44 = vector.broadcast %43 : i32 to vector<16x1xi32>
      %45 = arith.cmpi slt, %37, %44 : vector<16x1xi32>
      %46 = arith.andi %41, %45 : vector<16x1xi1>
      %c1_i32_6 = arith.constant 1 : i32
      %47 = arith.addi %3, %c1_i32_6 : i32
      %48 = arith.index_cast %47 : i32 to index
      %49 = memref.load %arg2[%48] : memref<4xi32, #tpu.memory_space<smem>>
      %50 = vector.broadcast %49 : i32 to vector<16x1xi32>
      %51 = arith.cmpi sge, %37, %50 : vector<16x1xi32>
      %c1_i32_7 = arith.constant 1 : i32
      %52 = arith.addi %3, %c1_i32_7 : i32
      %53 = arith.index_cast %52 : i32 to index
      %54 = memref.load %arg3[%53] : memref<4xi32, #tpu.memory_space<smem>>
      %55 = vector.broadcast %54 : i32 to vector<16x1xi32>
      %56 = arith.cmpi slt, %37, %55 : vector<16x1xi32>
      %57 = arith.andi %51, %56 : vector<16x1xi1>
      %58 = arith.ori %46, %57 : vector<16x1xi1>
      %59 = arith.index_cast %arg0 : i32 to index
      %60 = memref.load %arg4[%59] : memref<2xf32, #tpu.memory_space<smem>>
      %c0 = arith.constant 0 : index
      %c0_8 = arith.constant 0 : index
      %61 = vector.load %arg7[%c0, %c0_8] : memref<16x128xf32, #tpu.memory_space<vmem>>, vector<16x128xf32>
      %62 = vector.shape_cast %58 : vector<16x1xi1> to vector<16x1xi1>
      %63 = vector.broadcast %62 : vector<16x1xi1> to vector<16x128xi1>
      %64 = vector.broadcast %60 : f32 to vector<16x128xf32>
      %65 = arith.select %63, %64, %61 : vector<16x128xi1>, vector<16x128xf32>
      %c0_9 = arith.constant 0 : index
      %c0_10 = arith.constant 0 : index
      %66 = vector.load %arg7[%c0_9, %c0_10] : memref<16x128xf32, #tpu.memory_space<vmem>>, vector<16x128xf32>
      tpu.vector_store %arg7[%c0_9, %c0_10], %65 {strides = array<i32>} : memref<16x128xf32, #tpu.memory_space<vmem>>, vector<16x128xf32>,
      %c0_i32_11 = arith.constant 0 : i32
      %c0_i32_12 = arith.constant 0 : i32
      %67 = tpu.memref_slice %arg6[%arg0, %1, %c0_i32_12] : memref<2x64x128xf32, #tpu.memory_space<any>> -> memref<1x16x128xf32, #tpu.memory_space<any>>
      %68 = tpu.memref_squeeze %67 : memref<1x16x128xf32, #tpu.memory_space<any>> -> memref<16x128xf32, #tpu.memory_space<any>>
      %69 = tpu.memref_slice %arg8[%c0_i32_11] : memref<1x!tpu.dma_semaphore, #tpu.memory_space<semaphore_mem>> -> memref<1x!tpu.dma_semaphore, #tpu.memory_space<semaphore_mem>>
      %70 = tpu.memref_squeeze %69 : memref<1x!tpu.dma_semaphore, #tpu.memory_space<semaphore_mem>> -> memref<!tpu.dma_semaphore, #tpu.memory_space<semaphore_mem>>
      tpu.enqueue_dma source(%arg7 : memref<16x128xf32, #tpu.memory_space<vmem>>) target(%68 : memref<16x128xf32, #tpu.memory_space<any>>) target_semaphore(%70 : memref<!tpu.dma_semaphore, #tpu.memory_space<semaphore_mem>>)
      %c0_i32_13 = arith.constant 0 : i32
      %c0_i32_14 = arith.constant 0 : i32
      %71 = tpu.memref_slice %arg6[%arg0, %1, %c0_i32_14] : memref<2x64x128xf32, #tpu.memory_space<any>> -> memref<1x16x128xf32, #tpu.memory_space<any>>
      %72 = tpu.memref_squeeze %71 : memref<1x16x128xf32, #tpu.memory_space<any>> -> memref<16x128xf32, #tpu.memory_space<any>>
      %73 = tpu.memref_slice %arg8[%c0_i32_13] : memref<1x!tpu.dma_semaphore, #tpu.memory_space<semaphore_mem>> -> memref<1x!tpu.dma_semaphore, #tpu.memory_space<semaphore_mem>>
      %74 = tpu.memref_squeeze %73 : memref<1x!tpu.dma_semaphore, #tpu.memory_space<semaphore_mem>> -> memref<!tpu.dma_semaphore, #tpu.memory_space<semaphore_mem>>
      tpu.wait_dma2 semaphore(%74 : memref<!tpu.dma_semaphore, #tpu.memory_space<semaphore_mem>>) src(%arg7 : memref<16x128xf32, #tpu.memory_space<vmem>>) dst(%72 : memref<16x128xf32, #tpu.memory_space<any>>)
    } else {
    }
    return
  }
  func.func @transform_0(%arg0: i32, %arg1: i32) -> i32 {
    %c0_i32 = arith.constant 0 : i32
    %c0_i32_0 = arith.constant 0 : i32
    return %c0_i32 : i32
  }
  func.func @transform_1(%arg0: i32, %arg1: i32) -> i32 {
    %c0_i32 = arith.constant 0 : i32
    %c0_i32_0 = arith.constant 0 : i32
    return %c0_i32 : i32
  }
  func.func @transform_2(%arg0: i32, %arg1: i32) -> i32 {
    %c0_i32 = arith.constant 0 : i32
    %c0_i32_0 = arith.constant 0 : i32
    return %c0_i32 : i32
  }
}

</mosaic_0001>

<llo_original>
// kernel: tpu_custom_call.1
$region0: #{tpu_custom_call.1}
  #allocation0 [shape = 'u32[]', space=smem, size = 0x4, offset = 0x4, fixed_abs, tag = 'smem constant byte address 0x4 - core index']
  #allocation1 [shape = 'u32[144,128]{1,0:T(1,128)}', space=vmem, size = 0x12000, scoped, tag = 'internal scratch']
  #allocation2 [shape = 'f32[16,128]{1,0:T(8,128)}', space=vmem, size = 0x2000, scoped, tag = 'scratch operand']
  #allocation3 [shape = 's32[1]{0}', space=sflag, size = 0x4, scoped, tag = 'scratch operand']
  #allocation9 [shape = 's32[]', space=sflag, size = 0x4, offset = 0, fixed_abs, tag = 'sflag constant byte address 0x0 - dummy sync flag']
  #allocation10 [shape = 's32[]', space=sflag, size = 0x4, offset = 0, fixed_abs, tag = 'sflag constant byte address 0x0 - dummy sync flag']
  #allocation11 [shape = 'u32[]', space=smem, size = 0x4, offset = 0x44, fixed_abs, tag = 'smem constant byte address 0x44 - assertion arg 0']
  #allocation12 [shape = 'u32[]', space=smem, size = 0x4, offset = 0x48, fixed_abs, tag = 'smem constant byte address 0x48 - assertion arg 1']
  #allocation13 [shape = 's32[]', space=sflag, size = 0x4, offset = 0, fixed_abs, tag = 'sflag constant byte address 0x0 - dummy sync flag']
  #allocation14 [shape = 's32[]', space=sflag, size = 0x4, offset = 0, fixed_abs, tag = 'sflag constant byte address 0x0 - dummy sync flag']
  %s0 = inlined_call_operand.vmem [shape: s32[4], index: 0, kind: input, shape index: {}]
  %s1 = inlined_call_operand.vmem [shape: s32[4], index: 1, kind: input, shape index: {}]
  %s2 = inlined_call_operand.vmem [shape: f32[2], index: 2, kind: input, shape index: {}]
  %s3 = inlined_call_operand.hbm [shape: f32[2,64,128], index: 3, kind: input, shape index: {}, may-alias: {3,4}]
  %s4 = inlined_call_operand.hbm [shape: f32[2,64,128], index: 4, kind: output, shape index: {}, may-alias: {3,4}]
  %s5 = sld [smem:[#allocation0]]
  $region57: #{tpu_custom_call.1} parent=0
    _
  %s7 = ssub.s32 1, %s5
  %s8 = scalar_select 0, %s7, %s5
  $region1: #{tpu_custom_call.1} parent=0
    #allocation4 [shape = 'u8[512]{0}', space=smem, size = 0x200, scoped, tag = 'input window, operand 0, single buffered']
    #allocation5 [shape = 's32[2]{0}', space=sflag, size = 0x8, scoped, tag = 'scoped memory for tpu_custom_call.1']
    #allocation6 [shape = 'u8[512]{0}', space=smem, size = 0x200, scoped, tag = 'input window, operand 1, single buffered']
    #allocation7 [shape = 's32[1]{0}', space=sflag, size = 0x4, scoped, tag = 'scoped memory for tpu_custom_call.1']
    #allocation8 [shape = 'u8[512]{0}', space=smem, size = 0x200, scoped, tag = 'input window, operand 2, single buffered']
    %9 = vsyncpa [#allocation5], 0
    %10 = vsyncpa [#allocation7], 0
    loop: start=0, step=1, limit=9
    $region2: #{tpu_custom_call.1} parent=1 // loop_pre_header
      _
    $region3: #{tpu_custom_call.1} parent=1 // loop_header
      %s12 = sphi 0, %s16
      %p13 = scmp.ge.s32.totalorder %s12, 9
      %s18 = sphi 0, %s28
      %s19 = sphi 0, %s24
      %s20 = sphi 0, %s18
      %s21 = sphi 0, %s19
      %s29 = sphi 0, %s29
      %s31 = sphi 0, %s29
      %s39 = sphi 0, %s31
      %s43 = sphi 0, %s43
      %s45 = sphi 0, %s43
      %s53 = sphi 0, %s45
      %s57 = sphi 0, %s57
      %s59 = sphi 0, %s57
      %s67 = sphi 0, %s59
    $region4: #{tpu_custom_call.1} parent=1 // loop_header_branch
      %15 = sbr.rel (%p13) target = $region8
    $region5: #{tpu_custom_call.1} parent=1 // loop_body
      %s17 = ssub.s32 %s12, 1
      %s22 = sadd.s32 1, %s19
      %p23 = scmp.ge.s32.totalorder %s22, 4
      %s24 = scalar_select %p23, 0, %s22
      %s25 = sadd.s32 1, %s18
      %s26 = scalar_select %p23, %s25, %s18
      %p27 = scmp.ge.s32.totalorder %s26, 2
      %s28 = scalar_select %p27, 0, %s26
      %s30 = sadd.s32 %s29, 1
      %p32 = scmp.eq.s32.totalorder %s12, 7
      %p33 = scmp.ne.s32.totalorder %s29, %s31
      %p34 = scmp.eq.s32.totalorder %s12, 0
      %p35 = por %p33, %p34
      %p36 = scmp.ne.s32.totalorder %s29, %s31
      %p37 = scmp.eq.s32.totalorder %s17, 7
      %p38 = por %p36, %p37
      %p40 = scmp.ne.s32.totalorder %s31, %s39
      %p41 = scmp.eq.s32.totalorder %s17, 0
      %p42 = por %p40, %p41
      %s44 = sadd.s32 %s43, 1
      %p46 = scmp.eq.s32.totalorder %s12, 7
      %p47 = scmp.ne.s32.totalorder %s43, %s45
      %p48 = scmp.eq.s32.totalorder %s12, 0
      %p49 = por %p47, %p48
      %p50 = scmp.ne.s32.totalorder %s43, %s45
      %p51 = scmp.eq.s32.totalorder %s17, 7
      %p52 = por %p50, %p51
      %p54 = scmp.ne.s32.totalorder %s45, %s53
      %p55 = scmp.eq.s32.totalorder %s17, 0
      %p56 = por %p54, %p55
      %s58 = sadd.s32 %s57, 1
      %p60 = scmp.eq.s32.totalorder %s12, 7
      %p61 = scmp.ne.s32.totalorder %s57, %s59
      %p62 = scmp.eq.s32.totalorder %s12, 0
      %p63 = por %p61, %p62
      %p64 = scmp.ne.s32.totalorder %s57, %s59
      %p65 = scmp.eq.s32.totalorder %s17, 7
      %p66 = por %p64, %p65
      %p68 = scmp.ne.s32.totalorder %s59, %s67
      %p69 = scmp.eq.s32.totalorder %s17, 0
      %p70 = por %p68, %p69
      %p71 = scmp.le.s32.totalorder 1, %s12
      // Predicated region
      $region9: #{tpu_custom_call.1} parent=5 // pred_check
        %p72 = pneg %p71
      $region10: #{tpu_custom_call.1} parent=5 // pred_check_branch
        %74 = sbr.rel (%p72) target = $region12
      $region11: #{tpu_custom_call.1} parent=5 // pred_region
        %s75 = ssub.s32 %s12, 1
        // Predicated region
        $region13: #{tpu_custom_call.1} parent=11 // pred_check
          %p76 = pneg %p42
        $region14: #{tpu_custom_call.1} parent=11 // pred_check_branch
          %78 = sbr.rel (%p76) target = $region16
        $region15: #{tpu_custom_call.1} parent=11 // pred_region
          %s80 = ssub.s32 16, 16
          %81 = vsyncadd [#allocation5], %s80
          %s83 = sshll.u32 %s0, 4
          %s84 = int_to_ptr.vmem [resolvable:$true] %s83
          %86 = dma.vmem_to_smem %s84, 16, [#allocation4], [#allocation5]
        $region16: #{tpu_custom_call.1} parent=11 // pred_fallthru
          _
        // Predicated region
        $region17: #{tpu_custom_call.1} parent=11 // pred_check
          %p87 = pneg %p56
        $region18: #{tpu_custom_call.1} parent=11 // pred_check_branch
          %89 = sbr.rel (%p87) target = $region20
        $region19: #{tpu_custom_call.1} parent=11 // pred_region
          %s91 = ssub.s32 16, 16
          %92 = vsyncadd [#allocation7], %s91
          %s94 = sshll.u32 %s1, 4
          %s95 = int_to_ptr.vmem [resolvable:$true] %s94
          %97 = dma.vmem_to_smem %s95, 16, [#allocation6], [#allocation7]
        $region20: #{tpu_custom_call.1} parent=11 // pred_fallthru
          _
        // Predicated region
        $region21: #{tpu_custom_call.1} parent=11 // pred_check
          %p98 = pneg %p70
        $region22: #{tpu_custom_call.1} parent=11 // pred_check_branch
          %100 = sbr.rel (%p98) target = $region24
        $region23: #{tpu_custom_call.1} parent=11 // pred_region
          %s102 = ssub.s32 16, 16
          %103 = vsyncadd [#allocation7], %s102
          %s105 = sshll.u32 %s2, 4
          %s106 = int_to_ptr.vmem [resolvable:$true] %s105
          %108 = dma.vmem_to_smem %s106, 16, [#allocation8], [#allocation7]
        $region24: #{tpu_custom_call.1} parent=11 // pred_fallthru
          _
      $region12: #{tpu_custom_call.1} parent=5 // pred_fallthru
        _
      %p109 = scmp.lt.s32.totalorder %s12, 8
      // Predicated region
      $region25: #{tpu_custom_call.1} parent=5 // pred_check
        %p110 = pneg %p109
      $region26: #{tpu_custom_call.1} parent=5 // pred_check_branch
        %112 = sbr.rel (%p110) target = $region28
      $region27: #{tpu_custom_call.1} parent=5 // pred_region
        _
      $region28: #{tpu_custom_call.1} parent=5 // pred_fallthru
        _
      %p113 = scmp.le.s32.totalorder 1, %s12
      // Predicated region
      $region29: #{tpu_custom_call.1} parent=5 // pred_check
        %p114 = pneg %p113
      $region30: #{tpu_custom_call.1} parent=5 // pred_check_branch
        %116 = sbr.rel (%p114) target = $region32
      $region31: #{tpu_custom_call.1} parent=5 // pred_region
        %s117 = ssub.s32 %s12, 1
        // Predicated region
        $region33: #{tpu_custom_call.1} parent=31 // pred_check
          %p118 = pneg %p42
        $region34: #{tpu_custom_call.1} parent=31 // pred_check_branch
          %120 = sbr.rel (%p118) target = $region36
        $region35: #{tpu_custom_call.1} parent=31 // pred_region
          %121 = dma.done [#allocation5], 16
        $region36: #{tpu_custom_call.1} parent=31 // pred_fallthru
          _
        // Predicated region
        $region37: #{tpu_custom_call.1} parent=31 // pred_check
          %p122 = pneg %p56
        $region38: #{tpu_custom_call.1} parent=31 // pred_check_branch
          %124 = sbr.rel (%p122) target = $region40
        $region39: #{tpu_custom_call.1} parent=31 // pred_region
          %125 = dma.done [#allocation7], 16
        $region40: #{tpu_custom_call.1} parent=31 // pred_fallthru
          _
        // Predicated region
        $region41: #{tpu_custom_call.1} parent=31 // pred_check
          %p126 = pneg %p70
        $region42: #{tpu_custom_call.1} parent=31 // pred_check_branch
          %128 = sbr.rel (%p126) target = $region44
        $region43: #{tpu_custom_call.1} parent=31 // pred_region
          %129 = dma.done [#allocation7], 16
        $region44: #{tpu_custom_call.1} parent=31 // pred_fallthru
          _
        %130 = sfence
        %p131 = pneg %p42
        %p132 = pneg %p38
        %p133 = pneg %p56
        %p134 = pneg %p52
        %p135 = pneg %p70
        %p136 = pneg %p66
        %s137 = smul.u32 %s21, 16
        %s138 = sadd.s32 %s137, 16
        %s139 = smul.u32 %s20, 2
        %s140 = sld [smem:[#allocation4 + %s139]]
        %s141 = sld [smem:[#allocation6 + %s139]]
        %p142 = scmp.lt.s32.totalorder %s140, %s138
        %p143 = scmp.gt.s32.totalorder %s141, %s137
        %p144 = pnand %p142, %p143
        %p145 = pneg %p144
        %p146 = scmp.gt.s32.totalorder %s141, %s140
        %p147 = pnand %p145, %p146
        %p148 = pneg %p147
        %s149 = sadd.s32 %s139, 1
        %s150 = sld [smem:[#allocation4 + %s149]]
        %s151 = sld [smem:[#allocation6 + %s149]]
        %p152 = scmp.lt.s32.totalorder %s150, %s138
        %p153 = scmp.gt.s32.totalorder %s151, %s137
        %p154 = pnand %p152, %p153
        %p155 = pneg %p154
        %p156 = scmp.gt.s32.totalorder %s151, %s150
        %p157 = pnand %p155, %p156
        %p158 = pneg %p157
        %p159 = por %p148, %p158
        // Predicated region
        $region45: #{tpu_custom_call.1} parent=31 // pred_check
          %p160 = pneg %p159
        $region46: #{tpu_custom_call.1} parent=31 // pred_check_branch
          %162 = sbr.rel (%p160) target = $region48
        $region47: #{tpu_custom_call.1} parent=31 // pred_region
          %s163 = smul.u32 %s20, 64
          %s164 = sadd.s32 %s137, %s163
          %s165 = smul.addr %s164, 16
          %s166 = scalar_lea.hbm %s3, %s165
          // Predicated region
          $region49: #{tpu_custom_call.1} parent=47 // pred_check
            _
          $region50: #{tpu_custom_call.1} parent=47 // pred_check_branch
            %168 = sbr.rel target = $region52
          $region51: #{tpu_custom_call.1} parent=47 // pred_region
            %169 = sst [smem:[#allocation11]] [#allocation10]
            %170 = sst [smem:[#allocation12]] [#allocation9]
          $region52: #{tpu_custom_call.1} parent=47 // pred_fallthru
            _
          %172 = shalt.err (0)
          %s174 = sshll.u32 [#allocation2], 4
          %s175 = int_to_ptr.vmem [resolvable:$true] %s174
          %177 = dma.hbm_to_vmem [thread:$0]  %s166, 256, %s175, [#allocation3]
          %s178 = smul.u32 16, 1
          %s179 = sshll.u32 %s178, 4
          %180 = dma.done [#allocation3], %s179
          %v181 = vlaneseq
          %v182 = vshrl.u32 %v181, 7
          %v183 = vadd.s32 %v182, 8
          %v184 = vstv %s137
          %v185 = vadd.s32 %v184, %v182
          %v186 = vadd.s32 %v184, %v183
          %s187 = sld [smem:[#allocation4 + %s139]]
          %v188 = vstv %s187
          %vm189 = vcmp.ge.s32.totalorder %v185, %v188
          %vm190 = vcmp.ge.s32.totalorder %v186, %v188
          %s191 = sld [smem:[#allocation6 + %s139]]
          %v192 = vstv %s191
          %vm193 = vcmp.lt.s32.totalorder %v185, %v192
          %vm194 = vcmp.lt.s32.totalorder %v186, %v192
          %vm195 = vmand %vm189, %vm193
          %vm196 = vmand %vm190, %vm194
          %s197 = sld [smem:[#allocation4 + %s149]]
          %v198 = vstv %s197
          %vm199 = vcmp.ge.s32.totalorder %v185, %v198
          %vm200 = vcmp.ge.s32.totalorder %v186, %v198
          %s201 = sld [smem:[#allocation6 + %s149]]
          %v202 = vstv %s201
          %vm203 = vcmp.lt.s32.totalorder %v185, %v202
          %vm204 = vcmp.lt.s32.totalorder %v186, %v202
          %vm205 = vmand %vm199, %vm203
          %vm206 = vmand %vm200, %vm204
          %vm207 = vmor %vm195, %vm205
          %vm208 = vmor %vm196, %vm206
          %s209 = sld [smem:[#allocation8 + %s20]]
          %v210 = vld [vmem:[#allocation2] sm:$0xff]
          %v211 = vld [vmem:[#allocation2 + $0x8] sm:$0xff]
          %v212 = vsel %vm207, 1, 0
          %v213 = vsel %vm208, 1, 0
          %vm214 = vcmp.eq.s32.totalorder %v212, 1
          %vm215 = vcmp.eq.s32.totalorder %v213, 1
          %v216 = vstv %s209
          %v217 = vsel %vm214, %v216, %v210
          %v218 = vsel %vm215, %v216, %v211
          %219 = vst [vmem:[#allocation2] sm:$0xff] %v217
          %220 = vst [vmem:[#allocation2 + $0x8] sm:$0xff] %v218
          %s221 = smul.addr %s164, 16
          %s222 = scalar_lea.hbm %s4, %s221
          // Predicated region
          $region53: #{tpu_custom_call.1} parent=47 // pred_check
            _
          $region54: #{tpu_custom_call.1} parent=47 // pred_check_branch
            %224 = sbr.rel target = $region56
          $region55: #{tpu_custom_call.1} parent=47 // pred_region
            %225 = sst [smem:[#allocation11]] [#allocation14]
            %226 = sst [smem:[#allocation12]] [#allocation13]
          $region56: #{tpu_custom_call.1} parent=47 // pred_fallthru
            _
          %228 = shalt.err (0)
          %s230 = sshll.u32 [#allocation2], 4
          %s231 = int_to_ptr.vmem [resolvable:$true] %s230
          %233 = dma.vmem_to_hbm [thread:$0]  %s231, 256, %s222, [#allocation3]
          %s234 = sshll.u32 %s178, 4
          %235 = dma.done [#allocation3], %s234
        $region48: #{tpu_custom_call.1} parent=31 // pred_fallthru
          _
      $region32: #{tpu_custom_call.1} parent=5 // pred_fallthru
        _
    $region6: #{tpu_custom_call.1} parent=1 // loop_footer
      %s16 = sadd.s32 1, %s12
    $region7: #{tpu_custom_call.1} parent=1 // loop_footer_branch
      %11 = sbr.rel target = $region3
    $region8: #{tpu_custom_call.1} parent=1 // loop_exit
      _
    %236 = vsyncpa [#allocation5], 1
    %s237 = scalar_lea.sflag [#allocation5], 1
    %238 = vsyncpa %s237, 1
    %239 = vsyncpa [#allocation7], 1
  %240 = vsyncmov [#allocation3]
  %s241 = vpop.sfrf %240
  %p242 = scmp.eq.s32.totalorder %s241, 0
  %p243 = pneg %p242
  %245 = shalt.err (%p243)

</llo_original>
